<compile_context>
chip_gen: v7x
topology: tpu7x:2x2x1
jax: 0.10.0
libtpu: 0.0.40
codegen_flags: <defaults>
</compile_context>

<pallas_src>
import math

import jax
import jax.numpy as jnp
from jax.experimental import pallas as pl
from jax.experimental.pallas import tpu as pltpu


def gs_kernel(x_ref, w_ref, b_ref, o_ref):
    """One grid step = one block of TV fused LinearModules."""
    @pl.when(pl.program_id(0) == 0)
    def _():
        o_ref[...] = jnp.zeros_like(o_ref)

    # (B, D) @ (D, TV*OUT) -> (B, TV*OUT): one lane-dense MXU call per step.
    y = jnp.dot(x_ref[...], w_ref[...], preferred_element_type=jnp.float32)
    y = y + b_ref[...]                      # b_ref block is (1, TV*OUT)
    o_ref[...] += jnp.maximum(y, 0.0)       # accumulate in the resident output


def _choose_tv(V, D, OUT, target_bytes=2 * 1024 * 1024):
    """Pick a V-block size giving ~target_bytes of weights per DMA step."""
    per_vertex_bytes = D * OUT * 4
    tv = max(1, target_bytes // per_vertex_bytes)
    tv = min(int(tv), int(V))
    # Prefer a fused width TV*OUT that is a multiple of 128 lanes when possible.
    granule = 128 // math.gcd(128, OUT)
    if tv >= granule:
        tv = (tv // granule) * granule
    return max(1, int(tv))


def prepare_gs_params(vertices, weights, biases, tv=None):
    """
    One-time (init-time) parameter preparation — NOT part of the per-call path.

    vertices : (V, D)      weights : (V, OUT, D)     biases : (V, OUT)
    Returns (w_blk, b_blk, tv) with
      w_blk : (NB, D, TV*OUT)   b_blk : (NB, 1, TV*OUT)
    """
    V, OUT, D = weights.shape
    if tv is None:
        tv = _choose_tv(V, D, OUT)
    nb = pl.cdiv(V, tv)
    pad = nb * tv - V

    wt = jnp.transpose(weights, (0, 2, 1)).astype(jnp.float32)    # (V, D, OUT)
    # Fold vertices into biases: relu((x-v)@Wt + b) == relu(x@Wt + (b - v@Wt)).
    b_fold = biases.astype(jnp.float32) - jnp.einsum(
        "vd,vdo->vo", vertices.astype(jnp.float32), wt)

    if pad:
        # relu(x @ 0 + 0) == 0, so zero-padded vertices contribute nothing.
        wt = jnp.pad(wt, ((0, pad), (0, 0), (0, 0)))
        b_fold = jnp.pad(b_fold, ((0, pad), (0, 0)))

    w_blk = (wt.reshape(nb, tv, D, OUT)
               .transpose(0, 2, 1, 3)
               .reshape(nb, D, tv * OUT))
    b_blk = b_fold.reshape(nb, 1, tv * OUT)
    return w_blk, b_blk, int(tv)


def gs_module_forward(x, w_blk, b_blk, out_dim):
    """
    x      : (B, D) — semantic_vec
    w_blk  : (NB, D, TV*OUT), b_blk : (NB, 1, TV*OUT)  (from prepare_gs_params)
    returns: (B, OUT) float32
    """
    x = x.astype(jnp.float32)
    B, D = x.shape
    nb, _, W = w_blk.shape                      # W = TV * OUT

    fused = pl.pallas_call(
        gs_kernel,
        out_shape=jax.ShapeDtypeStruct((B, W), jnp.float32),
        grid_spec=pltpu.PrefetchScalarGridSpec(
            num_scalar_prefetch=0,
            grid=(nb,),
            in_specs=[
                pl.BlockSpec((B, D), lambda i: (0, 0)),          # x (resident)
                pl.BlockSpec((None, D, W), lambda i: (i, 0, 0)),  # weight block
                pl.BlockSpec((None, 1, W), lambda i: (i, 0, 0)),  # folded bias
            ],
            out_specs=pl.BlockSpec((B, W), lambda i: (0, 0)),    # accumulator
        ),
        compiler_params=pltpu.CompilerParams(
            dimension_semantics=("arbitrary",),  # V-block axis is a reduction
        ),
    )(x, w_blk, b_blk)

    # Tiny XLA epilogue: fold the TV vertices of each block back into OUT.
    tv = W // out_dim
    return fused.reshape(B, tv, out_dim).sum(axis=1)


def gs_module_ref(x, vertices, weights, biases):
    """Pure-JAX reference matching the PyTorch GSModule forward."""
    out = jnp.zeros((x.shape[0], weights.shape[1]), jnp.float32)
    for i in range(vertices.shape[0]):
        offs = x - vertices[i]
        out = out + jnp.maximum(offs @ weights[i].T + biases[i], 0.0)
    return out


if __name__ == "__main__":
    B, D, OUT, V = 2, 32, 16, 4  # small shapes consistent with the module

    key = jax.random.PRNGKey(0)
    k_x, k_v, k_w, k_b = jax.random.split(key, 4)

    x = jax.random.normal(k_x, (B, D), dtype=jnp.float32)
    vertices = jax.random.normal(k_v, (V, D), dtype=jnp.float32)
    # Deterministic init mimicking nn.Linear default (uniform in +/- 1/sqrt(D)).
    bound = 1.0 / jnp.sqrt(jnp.float32(D))
    weights = jax.random.uniform(k_w, (V, OUT, D), jnp.float32, -bound, bound)
    biases = jax.random.uniform(k_b, (V, OUT), jnp.float32, -bound, bound)

    ref = gs_module_ref(x, vertices, weights, biases)

    # 1) Default block size (TV == V here, grid of 1).
    w_blk, b_blk, _ = prepare_gs_params(vertices, weights, biases)
    out = jax.block_until_ready(gs_module_forward(x, w_blk, b_blk, OUT))
    assert out.shape == (B, OUT)
    assert jnp.allclose(out, ref, atol=2e-5, rtol=1e-5), "mismatch vs reference"

    # 2) Force TV=3 to exercise padding + multi-block accumulation (grid of 2).
    w_blk2, b_blk2, _ = prepare_gs_params(vertices, weights, biases, tv=3)
    out2 = jax.block_until_ready(gs_module_forward(x, w_blk2, b_blk2, OUT))
    assert jnp.allclose(out2, ref, atol=2e-5, rtol=1e-5), "mismatch (blocked V)"

    print("KERNEL_OK")
</pallas_src>

<mosaic_0001>
module attributes {stable_mosaic.version = 11 : i64} {
  func.func @gs_kernel(%arg0: i32, %arg1: memref<2x32xf32, #tpu.memory_space<vmem>>, %arg2: memref<1x32x64xf32, #tpu.memory_space<vmem>>, %arg3: memref<1x1x64xf32, #tpu.memory_space<vmem>>, %arg4: memref<2x64xf32, #tpu.memory_space<vmem>>) attributes {dimension_semantics = [#tpu.dimension_semantics<arbitrary>], iteration_bounds = array<i64: 1>, scalar_prefetch = 0 : i64, scratch_operands = 0 : i64, tpu.core_type = #tpu.core_type<tc>, window_params = [{pipeline_mode = #tpu.pipeline_mode<synchronous>, transform_indices = @transform_0, window_bounds = array<i64: 2, 32>}, {transform_indices = @transform_1, window_bounds = array<i64: 1, 32, 64>}, {transform_indices = @transform_2, window_bounds = array<i64: 1, 1, 64>}, {pipeline_mode = #tpu.pipeline_mode<synchronous>, transform_indices = @transform_3, window_bounds = array<i64: 2, 64>}]} {
    %c0_i32 = arith.constant 0 : i32
    %0 = arith.cmpi eq, %arg0, %c0_i32 : i32
    %1 = arith.extui %0 : i1 to i32
    %c0_i32_0 = arith.constant 0 : i32
    %2 = arith.cmpi ne, %1, %c0_i32_0 : i32
    scf.if %2 {
      %cst_13 = arith.constant 0.000000e+00 : f32
      %16 = vector.broadcast %cst_13 : f32 to vector<2x64xf32>
      %c0_14 = arith.constant 0 : index
      %c0_15 = arith.constant 0 : index
      %17 = vector.load %arg4[%c0_14, %c0_15] : memref<2x64xf32, #tpu.memory_space<vmem>>, vector<2x64xf32>
      tpu.vector_store %arg4[%c0_14, %c0_15], %16 {strides = array<i32>} : memref<2x64xf32, #tpu.memory_space<vmem>>, vector<2x64xf32>,
    } else {
    }
    %c0 = arith.constant 0 : index
    %c0_1 = arith.constant 0 : index
    %3 = vector.load %arg1[%c0, %c0_1] : memref<2x32xf32, #tpu.memory_space<vmem>>, vector<2x32xf32>
    %c0_2 = arith.constant 0 : index
    %c0_3 = arith.constant 0 : index
    %c0_4 = arith.constant 0 : index
    %4 = vector.load %arg2[%c0_2, %c0_3, %c0_4] : memref<1x32x64xf32, #tpu.memory_space<vmem>>, vector<1x32x64xf32>
    %5 = vector.shape_cast %4 : vector<1x32x64xf32> to vector<32x64xf32>
    %cst = arith.constant dense<0.000000e+00> : vector<2x64xf32>
    %6 = tpu.matmul %3, %5, %cst {dimension_numbers = #tpu.dot_dimension_numbers<[1], [0], [0], [1], [0, 0, 1, 1], [], []>} : vector<2x32xf32>, vector<32x64xf32>, vector<2x64xf32> -> vector<2x64xf32>
    %c0_5 = arith.constant 0 : index
    %c0_6 = arith.constant 0 : index
    %c0_7 = arith.constant 0 : index
    %7 = vector.load %arg3[%c0_5, %c0_6, %c0_7] : memref<1x1x64xf32, #tpu.memory_space<vmem>>, vector<1x1x64xf32>
    %8 = vector.shape_cast %7 : vector<1x1x64xf32> to vector<1x64xf32>
    %9 = vector.broadcast %8 : vector<1x64xf32> to vector<2x64xf32>
    %10 = arith.addf %6, %9 : vector<2x64xf32>
    %c0_8 = arith.constant 0 : index
    %c0_9 = arith.constant 0 : index
    %11 = vector.load %arg4[%c0_8, %c0_9] : memref<2x64xf32, #tpu.memory_space<vmem>>, vector<2x64xf32>
    %cst_10 = arith.constant 0.000000e+00 : f32
    %12 = vector.broadcast %cst_10 : f32 to vector<2x64xf32>
    %13 = arith.maximumf %10, %12 : vector<2x64xf32>
    %14 = arith.addf %11, %13 : vector<2x64xf32>
    %c0_11 = arith.constant 0 : index
    %c0_12 = arith.constant 0 : index
    %15 = vector.load %arg4[%c0_11, %c0_12] : memref<2x64xf32, #tpu.memory_space<vmem>>, vector<2x64xf32>
    tpu.vector_store %arg4[%c0_11, %c0_12], %14 {strides = array<i32>} : memref<2x64xf32, #tpu.memory_space<vmem>>, vector<2x64xf32>,
    return
  }
  func.func @transform_0(%arg0: i32) -> (i32, i32) {
    %c0_i32 = arith.constant 0 : i32
    %c0_i32_0 = arith.constant 0 : i32
    %c0_i32_1 = arith.constant 0 : i32
    return %c0_i32, %c0_i32_0 : i32, i32
  }
  func.func @transform_1(%arg0: i32) -> (i32, i32, i32) {
    %c0_i32 = arith.constant 0 : i32
    %c0_i32_0 = arith.constant 0 : i32
    %c0_i32_1 = arith.constant 0 : i32
    return %arg0, %c0_i32, %c0_i32_0 : i32, i32, i32
  }
  func.func @transform_2(%arg0: i32) -> (i32, i32, i32) {
    %c0_i32 = arith.constant 0 : i32
    %c0_i32_0 = arith.constant 0 : i32
    %c0_i32_1 = arith.constant 0 : i32
    return %arg0, %c0_i32, %c0_i32_0 : i32, i32, i32
  }
  func.func @transform_3(%arg0: i32) -> (i32, i32) {
    %c0_i32 = arith.constant 0 : i32
    %c0_i32_0 = arith.constant 0 : i32
    %c0_i32_1 = arith.constant 0 : i32
    return %c0_i32, %c0_i32_0 : i32, i32
  }
}

</mosaic_0001>

<llo_original>
// kernel: tpu_custom_call.1
$region0: #{tpu_custom_call.1}
  #allocation0 [shape = 'u32[]', space=smem, size = 0x4, offset = 0x4, fixed_abs, tag = 'smem constant byte address 0x4 - core index']
  #allocation1 [shape = 'u32[144,128]{1,0:T(1,128)}', space=vmem, size = 0x12000, scoped, tag = 'internal scratch']
  %s0 = inlined_call_operand.hbm [shape: f32[2,32], index: 0, kind: input, shape index: {}]
  %s1 = inlined_call_operand.hbm [shape: f32[1,32,64], index: 1, kind: input, shape index: {}]
  %s2 = inlined_call_operand.vmem [shape: f32[1,1,64], index: 2, kind: input, shape index: {}]
  %s3 = inlined_call_operand.hbm [shape: f32[2,64], index: 3, kind: output, shape index: {}]
  %s4 = sld [smem:[#allocation0]]
  $region34: #{tpu_custom_call.1} parent=0
    _
  %s6 = ssub.s32 1, %s4
  %s7 = scalar_select 0, %s6, %s4
  $region1: #{tpu_custom_call.1} parent=0
    #allocation2 [shape = 'u8[1024]{0}', space=vmem, size = 0x400, scoped, tag = 'input window, operand 0, single buffered']
    #allocation3 [shape = 's32[1]{0}', space=sflag, size = 0x4, scoped, tag = 'scoped memory for tpu_custom_call.1']
    #allocation4 [shape = 's32[1]{0}', space=sflag, size = 0x4, scoped, tag = 'scoped memory for tpu_custom_call.1']
    #allocation5 [shape = 'u8[16384]{0}', space=vmem, size = 0x4000, scoped, tag = 'input window, operand 1, single buffered']
    #allocation6 [shape = 's32[1]{0}', space=sflag, size = 0x4, scoped, tag = 'scoped memory for tpu_custom_call.1']
    #allocation7 [shape = 'u8[1024]{0}', space=vmem, size = 0x400, scoped, tag = 'output window, operand 0, single buffered']
    %8 = vsyncpa [#allocation3], 0
    %9 = vsyncpa [#allocation6], 0
    %10 = vsyncpa [#allocation4], 0
    // Predicated region
    $region2: #{tpu_custom_call.1} parent=1 // pred_check
      _
    $region3: #{tpu_custom_call.1} parent=1 // pred_check_branch
      %12 = sbr.rel (0) target = $region5
    $region4: #{tpu_custom_call.1} parent=1 // pred_region
      %s14 = ssub.s32 32, 32
      %15 = vsyncadd [#allocation3], %s14
      %s17 = sshll.u32 [#allocation2], 4
      %s18 = int_to_ptr.vmem [resolvable:$true] %s17
      %20 = dma.hbm_to_vmem [thread:$0]  %s0, 32, %s18, [#allocation3]
    $region5: #{tpu_custom_call.1} parent=1 // pred_fallthru
      _
    // Predicated region
    $region6: #{tpu_custom_call.1} parent=1 // pred_check
      _
    $region7: #{tpu_custom_call.1} parent=1 // pred_check_branch
      %22 = sbr.rel (0) target = $region9
    $region8: #{tpu_custom_call.1} parent=1 // pred_region
      %s24 = ssub.s32 512, 512
      %25 = vsyncadd [#allocation6], %s24
      %s26 = sshll.u32 [#allocation5], 4
      %s27 = int_to_ptr.vmem [resolvable:$true] %s26
      %32 = dma.hbm_to_vmem [thread:$0]  %s1, 512, %s27, [#allocation6], 128, 128, 8
    $region9: #{tpu_custom_call.1} parent=1 // pred_fallthru
      _
    // Predicated region
    $region10: #{tpu_custom_call.1} parent=1 // pred_check
      _
    $region11: #{tpu_custom_call.1} parent=1 // pred_check_branch
      %34 = sbr.rel (0) target = $region13
    $region12: #{tpu_custom_call.1} parent=1 // pred_region
      _
    $region13: #{tpu_custom_call.1} parent=1 // pred_fallthru
      _
    // Predicated region
    $region14: #{tpu_custom_call.1} parent=1 // pred_check
      _
    $region15: #{tpu_custom_call.1} parent=1 // pred_check_branch
      %36 = sbr.rel (0) target = $region17
    $region16: #{tpu_custom_call.1} parent=1 // pred_region
      %37 = dma.done [#allocation3], 32
    $region17: #{tpu_custom_call.1} parent=1 // pred_fallthru
      _
    // Predicated region
    $region18: #{tpu_custom_call.1} parent=1 // pred_check
      _
    $region19: #{tpu_custom_call.1} parent=1 // pred_check_branch
      %39 = sbr.rel (0) target = $region21
    $region20: #{tpu_custom_call.1} parent=1 // pred_region
      %40 = dma.done [#allocation6], 512
    $region21: #{tpu_custom_call.1} parent=1 // pred_fallthru
      _
    %p41 = scmp.eq.s32.totalorder 0, 0
    // Predicated region
    $region22: #{tpu_custom_call.1} parent=1 // pred_check
      %p42 = pneg %p41
    $region23: #{tpu_custom_call.1} parent=1 // pred_check_branch
      %44 = sbr.rel (%p42) target = $region25
    $region24: #{tpu_custom_call.1} parent=1 // pred_region
      %vm45 = vcmask 517120
      %46 = vst.msk [vmem:[#allocation7] sm:$0x3] %vm45, 0.0
    $region25: #{tpu_custom_call.1} parent=1 // pred_fallthru
      _
    %v47 = vld [vmem:[#allocation2] sm:$0x3]
    %v48 = vld [vmem:[#allocation5] sm:$0xff]
    %v49 = vld [vmem:[#allocation5 + $0x8] sm:$0xff]
    %v50 = vld [vmem:[#allocation5 + $0x10] sm:$0xff]
    %v51 = vld [vmem:[#allocation5 + $0x18] sm:$0xff]
    %v52 = vld [vmem:[%s2] sm:$0x1]
    %v54 = vlaneseq
    %v55 = vshrl.u32 %v54, 7
    %v56 = vsub.s32 0, %v55
    %v57 = vrot.slane %v52, %v56
    %vm59 = vcmask 261120
    %v61 = vsel %vm59, %v47, 0
    %63 = vmatprep.subr.mxu0 0.0
    %64 = vmatpush1.msra.mxu0 %v48
    %65 = vmatprep.subr.mxu0 0.0
    %66 = vmatpush1.msra.mxu0 %v49
    %67 = vmatprep.subr.mxu0 0.0
    %68 = vmatpush1.msra.mxu0 %v50
    %69 = vmatprep.subr.mxu0 0.0
    %70 = vmatpush1.msra.mxu0 %v51
    %71 = vmatprep.subr.mxu0 0.0
    %72 = vmatpush1.msra.mxu0 0.0
    %73 = vmatprep.subr.mxu0 0.0
    %74 = vmatpush1.msra.mxu0 0.0
    %75 = vmatprep.subr.mxu0 0.0
    %76 = vmatpush1.msra.mxu0 0.0
    %77 = vmatprep.subr.mxu0 0.0
    %78 = vmatpush1.msra.mxu0 0.0
    %79 = vmatprep.subr.mxu0 0.0
    %80 = vmatpush1.msra.mxu0 0.0
    %81 = vmatprep.subr.mxu0 0.0
    %82 = vmatpush1.msra.mxu0 0.0
    %83 = vmatprep.subr.mxu0 0.0
    %84 = vmatpush1.msra.mxu0 0.0
    %85 = vmatprep.subr.mxu0 0.0
    %86 = vmatpush1.msra.mxu0 0.0
    %87 = vmatprep.subr.mxu0 0.0
    %88 = vmatpush1.msra.mxu0 0.0
    %89 = vmatprep.subr.mxu0 0.0
    %90 = vmatpush1.msra.mxu0 0.0
    %91 = vmatprep.subr.mxu0 0.0
    %92 = vmatpush1.msra.mxu0 0.0
    %93 = vmatprep.subr.mxu0 0.0
    %94 = vmatpush1.msra.mxu0 0.0
    %95 = vmatprep.subr.mxu0 0.0
    %96 = vmatpush1.msra.mxu0 0.0
    %97 = vmatprep.subr.mxu0 0.0
    %98 = vmatpush1.msra.mxu0 0.0
    %99 = vmatprep.subr.mxu0 0.0
    %100 = vmatpush1.msra.mxu0 0.0
    %101 = vmatprep.subr.mxu0 0.0
    %102 = vmatpush1.msra.mxu0 0.0
    %103 = vmatprep.subr.mxu0 0.0
    %104 = vmatpush1.msra.mxu0 0.0
    %105 = vmatprep.subr.mxu0 0.0
    %106 = vmatpush1.msra.mxu0 0.0
    %107 = vmatprep.subr.mxu0 0.0
    %108 = vmatpush1.msra.mxu0 0.0
    %109 = vmatprep.subr.mxu0 0.0
    %110 = vmatpush1.msra.mxu0 0.0
    %111 = vmatprep.subr.mxu0 0.0
    %112 = vmatpush1.msra.mxu0 0.0
    %113 = vmatprep.subr.mxu0 0.0
    %114 = vmatpush1.msra.mxu0 0.0
    %115 = vmatprep.subr.mxu0 0.0
    %116 = vmatpush1.msra.mxu0 0.0
    %117 = vmatprep.subr.mxu0 0.0
    %118 = vmatpush1.msra.mxu0 0.0
    %119 = vmatprep.subr.mxu0 0.0
    %120 = vmatpush1.msra.mxu0 0.0
    %121 = vmatprep.subr.mxu0 0.0
    %122 = vmatpush1.msra.mxu0 0.0
    %123 = vmatprep.subr.mxu0 0.0
    %124 = vmatpush1.msra.mxu0 0.0
    %125 = vmatprep.subr.mxu0 0.0
    %126 = vmatpush1.msra.mxu0 0.0
    %127 = vmatprep.mubr.f32.mxu0 0.0
    %128 = vmatmul.mubr.f32.gmra.mrb[0].mxu0 %v61
    %v129 = vpop.f32.mrb[0].mxu0
    %v130 = vadd.f32 %v57, %v129
    %v131 = vpop.f32.mrb[0].mxu0
    %132 = vdwg.mxu0
    %v133 = vld [vmem:[#allocation7] sm:$0x3]
    %v134 = vmax.f32 %v130, 0.0
    %v135 = vadd.f32 %v133, %v134
    %vm136 = vcmask 517120
    %137 = vst.msk [vmem:[#allocation7] sm:$0x3] %vm136, %v135
    // Predicated region
    $region26: #{tpu_custom_call.1} parent=1 // pred_check
      _
    $region27: #{tpu_custom_call.1} parent=1 // pred_check_branch
      %139 = sbr.rel (0) target = $region29
    $region28: #{tpu_custom_call.1} parent=1 // pred_region
      %s141 = ssub.s32 32, 32
      %142 = vsyncadd [#allocation4], %s141
      %s144 = sshll.u32 [#allocation7], 4
      %s145 = int_to_ptr.vmem [resolvable:$true] %s144
      %147 = dma.vmem_to_hbm [thread:$0]  %s145, 32, %s3, [#allocation4]
    $region29: #{tpu_custom_call.1} parent=1 // pred_fallthru
      _
    // Predicated region
    $region30: #{tpu_custom_call.1} parent=1 // pred_check
      _
    $region31: #{tpu_custom_call.1} parent=1 // pred_check_branch
      %149 = sbr.rel (0) target = $region33
    $region32: #{tpu_custom_call.1} parent=1 // pred_region
      %150 = dma.done [#allocation4], 32
    $region33: #{tpu_custom_call.1} parent=1 // pred_fallthru
      _
    %151 = vsyncpa [#allocation3], 1
    %152 = vsyncpa [#allocation6], 1
    %153 = vsyncpa [#allocation4], 1

</llo_original>
